<compile_context>
chip_gen: v5e
topology: v5e:2x2
jax: 0.10.0
libtpu: 0.0.40
codegen_flags: <defaults>
</compile_context>

<pallas_src>
import jax
import jax.numpy as jnp
from jax.experimental import pallas as pl
from jax.experimental.pallas import tpu as pltpu


# ---------------------------------------------------------------------------
# Kernel body: purely VPU elementwise, memory (HBM DMA) bound.
# ---------------------------------------------------------------------------
def _regulation_kernel(x_ref, g1_ref, g2_ref, out1_ref, out2_ref):
    # x_ref: (TM, D) row tile; g*_ref: (1, D) gates resident across the grid.
    x = x_ref[...]
    out1_ref[...] = g1_ref[...] * x
    out2_ref[...] = g2_ref[...] * x


# ---------------------------------------------------------------------------
# Gate construction (plain JAX glue, negligible cost).
# Mirrors: cat([(g[i]/tau).softmax(-1).unsqueeze(-1).repeat(1, dims[i])], -1)
# softmax over each scalar is identically 1.0, but we compute it the same way.
# ---------------------------------------------------------------------------
def build_gate(g_param, tau, dims):
    per_field = jax.nn.softmax((g_param / tau)[:, None], axis=-1)[:, 0]  # (F,) == 1.0
    gate = jnp.repeat(per_field, jnp.asarray(dims), total_repeat_length=sum(dims))
    return gate[None, :]                                                  # (1, sum(dims))


# ---------------------------------------------------------------------------
# Tile sizing / VMEM budgets.
# ---------------------------------------------------------------------------
_TARGET_TILE_BYTES = 8 * 1024 * 1024          # per x row tile (amortizes step overhead)
_SUBLANE_MULTIPLE = {1: 32, 2: 16, 4: 8}      # dtype bytes -> packed sublane multiple


def _vmem_budgets():
    """(tile_budget_bytes, scoped_vmem_limit_bytes), generation-aware."""
    cap = None
    try:
        info = pltpu.get_tpu_info()
        cap = getattr(info, "vmem_capacity_bytes", None)
    except Exception:
        cap = None
    if cap is not None and cap <= 64 * 1024 * 1024:
        # v7x-class: 64 MiB physical VMEM per TensorCore -> leave headroom.
        return 16 * 1024 * 1024, 36 * 1024 * 1024
    # v5e / v6e: 128 MiB physical VMEM.
    return 32 * 1024 * 1024, 48 * 1024 * 1024


def _choose_block_rows(batch, d_lanes, dtype_bytes, tile_budget_bytes):
    sub = _SUBLANE_MULTIPLE.get(dtype_bytes, 8)
    row_bytes = max(1, d_lanes * dtype_bytes)

    # Target tile size by bytes (no arbitrary row cap).
    tm = max(sub, _TARGET_TILE_BYTES // row_bytes)

    # Double-buffered live footprint ~= 2 * (1 input + 2 output) row tiles.
    vmem_rows = max(sub, tile_budget_bytes // (6 * row_bytes))
    tm = min(tm, vmem_rows)

    # Keep >= ~4 row tiles when the batch allows (megacore sharding on v7x).
    if batch >= 4 * sub:
        quarter = max(sub, (pl.cdiv(batch, 4) // sub) * sub)
        tm = min(tm, quarter)

    # Never larger than the (sublane-rounded-up) batch.
    tm = min(tm, max(sub, ((batch + sub - 1) // sub) * sub))

    return max(sub, (tm // sub) * sub)


# ---------------------------------------------------------------------------
# Public wrapper.
# ---------------------------------------------------------------------------
def regulation_module(x, g1_param, g2_param, dims, tau, use_regulation=True,
                      block_rows=None, short_circuit_identity_gates=False):
    if not use_regulation:
        return x, x

    B, D = x.shape
    assert D == sum(dims)

    if short_circuit_identity_gates:
        # softmax over a scalar is identically 1.0 -> out1 == out2 == x.
        # Recommended in production (or fuse the multiply into consumers).
        return x, x

    g1 = build_gate(g1_param, tau, dims).astype(x.dtype)   # (1, D)
    g2 = build_gate(g2_param, tau, dims).astype(x.dtype)   # (1, D)

    dtype_bytes = jnp.dtype(x.dtype).itemsize
    tile_budget, vmem_limit = _vmem_budgets()

    if block_rows is None:
        tm = _choose_block_rows(B, D, dtype_bytes, tile_budget)
    else:
        sub = _SUBLANE_MULTIPLE.get(dtype_bytes, 8)
        tm = max(sub, (int(block_rows) // sub) * sub)

    # No padding / slicing: lane dim of every block equals the full array dim
    # D, and Pallas masks the ragged trailing row tile of the cdiv grid.
    grid = (pl.cdiv(B, tm),)

    cost = pl.CostEstimate(
        flops=2 * B * D,
        transcendentals=0,
        bytes_accessed=(3 * B * D + 2 * D) * dtype_bytes,
    )

    out1, out2 = pl.pallas_call(
        _regulation_kernel,
        out_shape=(
            jax.ShapeDtypeStruct((B, D), x.dtype),
            jax.ShapeDtypeStruct((B, D), x.dtype),
        ),
        grid=grid,
        in_specs=[
            pl.BlockSpec((tm, D), lambda i: (i, 0)),   # x row tile
            pl.BlockSpec((1, D), lambda i: (0, 0)),    # g1: resident across grid
            pl.BlockSpec((1, D), lambda i: (0, 0)),    # g2: resident across grid
        ],
        out_specs=(
            pl.BlockSpec((tm, D), lambda i: (i, 0)),
            pl.BlockSpec((tm, D), lambda i: (i, 0)),
        ),
        compiler_params=pltpu.CompilerParams(
            dimension_semantics=("parallel",),
            vmem_limit_bytes=vmem_limit,
        ),
        cost_estimate=cost,
    )(x, g1, g2)

    return out1, out2


if __name__ == "__main__":
    # Small shapes consistent with the module: 8 fields x 16-dim embeddings
    # -> D = 128 (lane-dense), batch = 20 (not a tile multiple -> exercises
    # the ragged-trailing-tile masking), block_rows = 8 -> grid of 3 steps
    # (exercises pipelined tiling and the resident gate blocks).
    num_fields = 8
    dims = [16] * num_fields
    tau = 1.0
    B = 20
    D = sum(dims)

    key = jax.random.PRNGKey(0)
    x = jax.random.normal(key, (B, D), dtype=jnp.float32)

    # Parameters initialized exactly as in __init__: torch.ones(num_fields).
    g1_param = jnp.ones((num_fields,), dtype=jnp.float32)
    g2_param = jnp.ones((num_fields,), dtype=jnp.float32)

    out1, out2 = regulation_module(x, g1_param, g2_param, dims, tau,
                                   use_regulation=True, block_rows=8)
    out1 = jax.block_until_ready(out1)
    out2 = jax.block_until_ready(out2)

    # Reference check (pure JAX) — per the torch code the gates are 1.0.
    ref1 = build_gate(g1_param, tau, dims) * x
    ref2 = build_gate(g2_param, tau, dims) * x
    assert out1.shape == (B, D) and out2.shape == (B, D)
    assert jnp.allclose(out1, ref1, atol=1e-6), "out1 mismatch"
    assert jnp.allclose(out2, ref2, atol=1e-6), "out2 mismatch"

    # Also sanity-check the auto tile-size path (no explicit block_rows).
    out1b, out2b = regulation_module(x, g1_param, g2_param, dims, tau)
    assert jnp.allclose(jax.block_until_ready(out1b), ref1, atol=1e-6)
    assert jnp.allclose(jax.block_until_ready(out2b), ref2, atol=1e-6)

    print("KERNEL_OK")
</pallas_src>

<mosaic_0001>
module attributes {stable_mosaic.version = 11 : i64} {
  func.func @_regulation_kernel(%arg0: i32, %arg1: memref<8x128xf32, #tpu.memory_space<vmem>>, %arg2: memref<1x128xf32, #tpu.memory_space<vmem>>, %arg3: memref<1x128xf32, #tpu.memory_space<vmem>>, %arg4: memref<8x128xf32, #tpu.memory_space<vmem>>, %arg5: memref<8x128xf32, #tpu.memory_space<vmem>>) attributes {dimension_semantics = [#tpu.dimension_semantics<parallel>], iteration_bounds = array<i64: 3>, scalar_prefetch = 0 : i64, scratch_operands = 0 : i64, tpu.core_type = #tpu.core_type<tc>, window_params = [{transform_indices = @transform_0, window_bounds = array<i64: 8, 128>}, {pipeline_mode = #tpu.pipeline_mode<synchronous>, transform_indices = @transform_1, window_bounds = array<i64: 1, 128>}, {pipeline_mode = #tpu.pipeline_mode<synchronous>, transform_indices = @transform_2, window_bounds = array<i64: 1, 128>}, {transform_indices = @transform_3, window_bounds = array<i64: 8, 128>}, {transform_indices = @transform_4, window_bounds = array<i64: 8, 128>}]} {
    %c0 = arith.constant 0 : index
    %c0_0 = arith.constant 0 : index
    %0 = vector.load %arg1[%c0, %c0_0] : memref<8x128xf32, #tpu.memory_space<vmem>>, vector<8x128xf32>
    %c0_1 = arith.constant 0 : index
    %c0_2 = arith.constant 0 : index
    %1 = vector.load %arg2[%c0_1, %c0_2] : memref<1x128xf32, #tpu.memory_space<vmem>>, vector<1x128xf32>
    %2 = vector.broadcast %1 : vector<1x128xf32> to vector<8x128xf32>
    %3 = arith.mulf %2, %0 : vector<8x128xf32>
    %c0_3 = arith.constant 0 : index
    %c0_4 = arith.constant 0 : index
    %4 = vector.load %arg4[%c0_3, %c0_4] : memref<8x128xf32, #tpu.memory_space<vmem>>, vector<8x128xf32>
    tpu.vector_store %arg4[%c0_3, %c0_4], %3 {strides = array<i32>} : memref<8x128xf32, #tpu.memory_space<vmem>>, vector<8x128xf32>,
    %c0_5 = arith.constant 0 : index
    %c0_6 = arith.constant 0 : index
    %5 = vector.load %arg3[%c0_5, %c0_6] : memref<1x128xf32, #tpu.memory_space<vmem>>, vector<1x128xf32>
    %6 = vector.broadcast %5 : vector<1x128xf32> to vector<8x128xf32>
    %7 = arith.mulf %6, %0 : vector<8x128xf32>
    %c0_7 = arith.constant 0 : index
    %c0_8 = arith.constant 0 : index
    %8 = vector.load %arg5[%c0_7, %c0_8] : memref<8x128xf32, #tpu.memory_space<vmem>>, vector<8x128xf32>
    tpu.vector_store %arg5[%c0_7, %c0_8], %7 {strides = array<i32>} : memref<8x128xf32, #tpu.memory_space<vmem>>, vector<8x128xf32>,
    return
  }
  func.func @transform_0(%arg0: i32) -> (i32, i32) {
    %c0_i32 = arith.constant 0 : i32
    %c0_i32_0 = arith.constant 0 : i32
    return %arg0, %c0_i32 : i32, i32
  }
  func.func @transform_1(%arg0: i32) -> (i32, i32) {
    %c0_i32 = arith.constant 0 : i32
    %c0_i32_0 = arith.constant 0 : i32
    %c0_i32_1 = arith.constant 0 : i32
    return %c0_i32, %c0_i32_0 : i32, i32
  }
  func.func @transform_2(%arg0: i32) -> (i32, i32) {
    %c0_i32 = arith.constant 0 : i32
    %c0_i32_0 = arith.constant 0 : i32
    %c0_i32_1 = arith.constant 0 : i32
    return %c0_i32, %c0_i32_0 : i32, i32
  }
  func.func @transform_3(%arg0: i32) -> (i32, i32) {
    %c0_i32 = arith.constant 0 : i32
    %c0_i32_0 = arith.constant 0 : i32
    return %arg0, %c0_i32 : i32, i32
  }
  func.func @transform_4(%arg0: i32) -> (i32, i32) {
    %c0_i32 = arith.constant 0 : i32
    %c0_i32_0 = arith.constant 0 : i32
    return %arg0, %c0_i32 : i32, i32
  }
}

</mosaic_0001>

<llo_original>
// kernel: tpu_custom_call.1
$region0: #{tpu_custom_call.1}
  #allocation0 [shape = 'u32[]', space=smem, size = 0x4, offset = 0x4, fixed_abs, tag = 'smem constant byte address 0x4 - core index']
  #allocation1 [shape = 'u32[72,128]{1,0:T(1,128)}', space=vmem, size = 0x9000, scoped, tag = 'internal scratch']
  %s0 = inlined_call_operand.hbm [shape: f32[20,128], index: 0, kind: input, shape index: {}]
  %s1 = inlined_call_operand.hbm [shape: f32[1,128], index: 1, kind: input, shape index: {}]
  %s2 = inlined_call_operand.vmem [shape: f32[1,128], index: 2, kind: input, shape index: {}]
  %s3 = inlined_call_operand.hbm [shape: f32[20,128], index: 3, kind: output, shape index: {0}]
  %s4 = inlined_call_operand.hbm [shape: f32[20,128], index: 4, kind: output, shape index: {1}]
  %5 = xla_tuple %s3, %s4
  %s6 = sld [smem:[#allocation0]]
  $region61: #{tpu_custom_call.1} parent=0
    _
  %s8 = ssub.s32 1, %s6
  %s9 = scalar_select 0, %s8, %s6
  $region1: #{tpu_custom_call.1} parent=0
    #allocation2 [shape = 'u8[8192]{0}', space=vmem, size = 0x2000, scoped, tag = 'input window, operand 0']
    #allocation3 [shape = 's32[2]{0}', space=sflag, size = 0x8, scoped, tag = 'scoped memory for tpu_custom_call.1']
    #allocation4 [shape = 's32[2]{0}', space=sflag, size = 0x8, scoped, tag = 'scoped memory for tpu_custom_call.1']
    #allocation5 [shape = 'u8[512]{0}', space=vmem, size = 0x400, scoped, tag = 'input window, operand 1, single buffered']
    #allocation6 [shape = 's32[1]{0}', space=sflag, size = 0x4, scoped, tag = 'scoped memory for tpu_custom_call.1']
    #allocation7 [shape = 'u8[8192]{0}', space=vmem, size = 0x2000, scoped, tag = 'output window, operand 0']
    #allocation8 [shape = 'u8[8192]{0}', space=vmem, size = 0x2000, scoped, tag = 'output window, operand 1']
    #allocation9 [shape = 's32[2]{0}', space=sflag, size = 0x8, scoped, tag = 'scoped memory for tpu_custom_call.1']
    %10 = vsyncpa [#allocation3], 0
    %s11 = scalar_lea.sflag [#allocation3], 1
    %12 = vsyncpa %s11, 0
    %13 = vsyncpa [#allocation6], 0
    %14 = vsyncpa [#allocation4], 0
    %s15 = scalar_lea.sflag [#allocation4], 1
    %16 = vsyncpa %s15, 0
    %17 = vsyncpa [#allocation9], 0
    %s18 = scalar_lea.sflag [#allocation9], 1
    %19 = vsyncpa %s18, 0
    loop: start=0, step=1, limit=5
    $region2: #{tpu_custom_call.1} parent=1 // loop_pre_header
      _
    $region3: #{tpu_custom_call.1} parent=1 // loop_header
      %s21 = sphi 0, %s25
      %p22 = scmp.ge.s32.totalorder %s21, 5
      %s31 = sphi 0, %s33
      %s34 = sphi 0, %s31
      %s35 = sphi 0, %s34
      %s51 = sphi 0, %s35
      %s55 = sphi 0, %s55
      %s57 = sphi 0, %s55
      %s58 = sphi 0, %s57
      %s72 = sphi 0, %s58
      %s76 = sphi 0, %s76
      %s78 = sphi 0, %s76
      %s79 = sphi 0, %s78
      %s93 = sphi 0, %s79
      %s99 = sphi 0, %s101
      %s102 = sphi 0, %s99
      %s103 = sphi 0, %s102
      %s119 = sphi 0, %s103
      %s125 = sphi 0, %s127
      %s128 = sphi 0, %s125
      %s129 = sphi 0, %s128
      %s145 = sphi 0, %s129
    $region4: #{tpu_custom_call.1} parent=1 // loop_header_branch
      %24 = sbr.rel (%p22) target = $region8
    $region5: #{tpu_custom_call.1} parent=1 // loop_body
      %s26 = ssub.s32 %s21, 1
      %s27 = ssub.s32 %s21, 2
      %s28 = sadd.s32 %s21, 1
      %s29 = ssub.s32 %s21, %s28
      %p30 = scmp.eq.s32.totalorder %s29, 0
      %s32 = sadd.s32 %s31, 1
      %s33 = scalar_select %p30, %s31, %s32
      %p36 = pneg %p30
      %p37 = scmp.eq.s32.totalorder %s21, 2
      %p38 = por %p36, %p37
      %p39 = scmp.ne.s32.totalorder %s31, %s34
      %p40 = scmp.eq.s32.totalorder %s21, 0
      %p41 = por %p39, %p40
      %p42 = scmp.ne.s32.totalorder %s31, %s34
      %p43 = scmp.eq.s32.totalorder %s26, 2
      %p44 = por %p42, %p43
      %p45 = scmp.ne.s32.totalorder %s34, %s35
      %p46 = scmp.eq.s32.totalorder %s26, 0
      %p47 = por %p45, %p46
      %p48 = scmp.ne.s32.totalorder %s34, %s35
      %p49 = scmp.eq.s32.totalorder %s27, 2
      %p50 = por %p48, %p49
      %p52 = scmp.ne.s32.totalorder %s35, %s51
      %p53 = scmp.eq.s32.totalorder %s27, 0
      %p54 = por %p52, %p53
      %s56 = sadd.s32 %s55, 1
      %p59 = scmp.eq.s32.totalorder %s21, 2
      %p60 = scmp.ne.s32.totalorder %s55, %s57
      %p61 = scmp.eq.s32.totalorder %s21, 0
      %p62 = por %p60, %p61
      %p63 = scmp.ne.s32.totalorder %s55, %s57
      %p64 = scmp.eq.s32.totalorder %s26, 2
      %p65 = por %p63, %p64
      %p66 = scmp.ne.s32.totalorder %s57, %s58
      %p67 = scmp.eq.s32.totalorder %s26, 0
      %p68 = por %p66, %p67
      %p69 = scmp.ne.s32.totalorder %s57, %s58
      %p70 = scmp.eq.s32.totalorder %s27, 2
      %p71 = por %p69, %p70
      %p73 = scmp.ne.s32.totalorder %s58, %s72
      %p74 = scmp.eq.s32.totalorder %s27, 0
      %p75 = por %p73, %p74
      %s77 = sadd.s32 %s76, 1
      %p80 = scmp.eq.s32.totalorder %s21, 2
      %p81 = scmp.ne.s32.totalorder %s76, %s78
      %p82 = scmp.eq.s32.totalorder %s21, 0
      %p83 = por %p81, %p82
      %p84 = scmp.ne.s32.totalorder %s76, %s78
      %p85 = scmp.eq.s32.totalorder %s26, 2
      %p86 = por %p84, %p85
      %p87 = scmp.ne.s32.totalorder %s78, %s79
      %p88 = scmp.eq.s32.totalorder %s26, 0
      %p89 = por %p87, %p88
      %p90 = scmp.ne.s32.totalorder %s78, %s79
      %p91 = scmp.eq.s32.totalorder %s27, 2
      %p92 = por %p90, %p91
      %p94 = scmp.ne.s32.totalorder %s79, %s93
      %p95 = scmp.eq.s32.totalorder %s27, 0
      %p96 = por %p94, %p95
      %s97 = ssub.s32 %s21, %s28
      %p98 = scmp.eq.s32.totalorder %s97, 0
      %s100 = sadd.s32 %s99, 1
      %s101 = scalar_select %p98, %s99, %s100
      %p104 = pneg %p98
      %p105 = scmp.eq.s32.totalorder %s21, 2
      %p106 = por %p104, %p105
      %p107 = scmp.ne.s32.totalorder %s99, %s102
      %p108 = scmp.eq.s32.totalorder %s21, 0
      %p109 = por %p107, %p108
      %p110 = scmp.ne.s32.totalorder %s99, %s102
      %p111 = scmp.eq.s32.totalorder %s26, 2
      %p112 = por %p110, %p111
      %p113 = scmp.ne.s32.totalorder %s102, %s103
      %p114 = scmp.eq.s32.totalorder %s26, 0
      %p115 = por %p113, %p114
      %p116 = scmp.ne.s32.totalorder %s102, %s103
      %p117 = scmp.eq.s32.totalorder %s27, 2
      %p118 = por %p116, %p117
      %p120 = scmp.ne.s32.totalorder %s103, %s119
      %p121 = scmp.eq.s32.totalorder %s27, 0
      %p122 = por %p120, %p121
      %s123 = ssub.s32 %s21, %s28
      %p124 = scmp.eq.s32.totalorder %s123, 0
      %s126 = sadd.s32 %s125, 1
      %s127 = scalar_select %p124, %s125, %s126
      %p130 = pneg %p124
      %p131 = scmp.eq.s32.totalorder %s21, 2
      %p132 = por %p130, %p131
      %p133 = scmp.ne.s32.totalorder %s125, %s128
      %p134 = scmp.eq.s32.totalorder %s21, 0
      %p135 = por %p133, %p134
      %p136 = scmp.ne.s32.totalorder %s125, %s128
      %p137 = scmp.eq.s32.totalorder %s26, 2
      %p138 = por %p136, %p137
      %p139 = scmp.ne.s32.totalorder %s128, %s129
      %p140 = scmp.eq.s32.totalorder %s26, 0
      %p141 = por %p139, %p140
      %p142 = scmp.ne.s32.totalorder %s128, %s129
      %p143 = scmp.eq.s32.totalorder %s27, 2
      %p144 = por %p142, %p143
      %p146 = scmp.ne.s32.totalorder %s129, %s145
      %p147 = scmp.eq.s32.totalorder %s27, 0
      %p148 = por %p146, %p147
      %p149 = scmp.le.s32.totalorder 1, %s21
      %p150 = scmp.lt.s32.totalorder %s21, 4
      %p151 = pnand %p149, %p150
      %p152 = pneg %p151
      // Predicated region
      $region9: #{tpu_custom_call.1} parent=5 // pred_check
        _
      $region10: #{tpu_custom_call.1} parent=5 // pred_check_branch
        %154 = sbr.rel (%p151) target = $region12
      $region11: #{tpu_custom_call.1} parent=5 // pred_region
        %s155 = ssub.s32 %s21, 1
        // Predicated region
        $region13: #{tpu_custom_call.1} parent=11 // pred_check
          %p156 = pneg %p68
        $region14: #{tpu_custom_call.1} parent=11 // pred_check_branch
          %158 = sbr.rel (%p156) target = $region16
        $region15: #{tpu_custom_call.1} parent=11 // pred_region
          %160 = vsyncadd [#allocation6], 0
          %s162 = sshll.u32 %s1, 4
          %s163 = int_to_ptr.hbm [resolvable:$true] %s162
          %s164 = sshll.u32 [#allocation5], 4
          %s165 = int_to_ptr.vmem [resolvable:$true] %s164
          %167 = dma.hbm_to_vmem [thread:$0]  %s163, 16, %s165, [#allocation6]
        $region16: #{tpu_custom_call.1} parent=11 // pred_fallthru
          _
        // Predicated region
        $region17: #{tpu_custom_call.1} parent=11 // pred_check
          %p168 = pneg %p89
        $region18: #{tpu_custom_call.1} parent=11 // pred_check_branch
          %170 = sbr.rel (%p168) target = $region20
        $region19: #{tpu_custom_call.1} parent=11 // pred_region
          _
        $region20: #{tpu_custom_call.1} parent=11 // pred_fallthru
          _
      $region12: #{tpu_custom_call.1} parent=5 // pred_fallthru
        _
      %p171 = scmp.lt.s32.totalorder %s21, 3
      // Predicated region
      $region21: #{tpu_custom_call.1} parent=5 // pred_check
        %p172 = pneg %p171
      $region22: #{tpu_custom_call.1} parent=5 // pred_check_branch
        %174 = sbr.rel (%p172) target = $region24
      $region23: #{tpu_custom_call.1} parent=5 // pred_region
        // Predicated region
        $region25: #{tpu_custom_call.1} parent=23 // pred_check
          %p175 = pneg %p41
        $region26: #{tpu_custom_call.1} parent=23 // pred_check_branch
          %177 = sbr.rel (%p175) target = $region28
        $region27: #{tpu_custom_call.1} parent=23 // pred_region
          %s178 = sand.u32 %s31, 1
          %s179 = scalar_lea.sflag [#allocation3], %s178
          %s180 = sand.u32 %s31, 1
          %s181 = smul.addr %s180, 8
          %s182 = scalar_lea.vmem [#allocation2], %s181
          %184 = vsyncadd %s179, 0
          %s185 = smul.addr %s21, 8
          %s186 = scalar_lea.hbm %s0, %s185
          %s188 = sshll.u32 %s186, 4
          %s189 = int_to_ptr.hbm [resolvable:$true] %s188
          %s190 = sshll.u32 %s182, 4
          %s191 = int_to_ptr.vmem [resolvable:$true] %s190
          %193 = dma.hbm_to_vmem [thread:$0]  %s189, 128, %s191, %s179
        $region28: #{tpu_custom_call.1} parent=23 // pred_fallthru
          _
      $region24: #{tpu_custom_call.1} parent=5 // pred_fallthru
        _
      %p194 = scmp.le.s32.totalorder 1, %s21
      %p195 = scmp.lt.s32.totalorder %s21, 4
      %p196 = pnand %p194, %p195
      %p197 = pneg %p196
      // Predicated region
      $region29: #{tpu_custom_call.1} parent=5 // pred_check
        _
      $region30: #{tpu_custom_call.1} parent=5 // pred_check_branch
        %199 = sbr.rel (%p196) target = $region32
      $region31: #{tpu_custom_call.1} parent=5 // pred_region
        %s200 = ssub.s32 %s21, 1
        %s201 = sand.u32 %s34, 1
        %s202 = scalar_lea.sflag [#allocation3], %s201
        %s203 = sand.u32 %s34, 1
        %s204 = smul.addr %s203, 8
        %s205 = scalar_lea.vmem [#allocation2], %s204
        // Predicated region
        $region33: #{tpu_custom_call.1} parent=31 // pred_check
          %p206 = pneg %p47
        $region34: #{tpu_custom_call.1} parent=31 // pred_check_branch
          %208 = sbr.rel (%p206) target = $region36
        $region35: #{tpu_custom_call.1} parent=31 // pred_region
          %210 = dma.done %s202, 128
        $region36: #{tpu_custom_call.1} parent=31 // pred_fallthru
          _
        // Predicated region
        $region37: #{tpu_custom_call.1} parent=31 // pred_check
          %p211 = pneg %p68
        $region38: #{tpu_custom_call.1} parent=31 // pred_check_branch
          %213 = sbr.rel (%p211) target = $region40
        $region39: #{tpu_custom_call.1} parent=31 // pred_region
          %215 = dma.done [#allocation6], 16
        $region40: #{tpu_custom_call.1} parent=31 // pred_fallthru
          _
        %s216 = sand.u32 %s34, 1
        %s217 = scalar_lea.sflag [#allocation3], %s216
        %s218 = sand.u32 %s34, 1
        %s219 = smul.addr %s218, 8
        %s220 = scalar_lea.vmem [#allocation2], %s219
        %p221 = pneg %p47
        %p222 = pneg %p44
        %p223 = pneg %p68
        %p224 = pneg %p65
        %p225 = pneg %p89
        %p226 = pneg %p86
        %p227 = pneg %p115
        %p228 = pneg %p112
        %s229 = sand.u32 %s102, 1
        %s230 = scalar_lea.sflag [#allocation4], %s229
        %s231 = sand.u32 %s102, 1
        %s232 = smul.addr %s231, 8
        %s233 = scalar_lea.vmem [#allocation7], %s232
        %p234 = pneg %p141
        %p235 = pneg %p138
        %s236 = sand.u32 %s128, 1
        %s237 = scalar_lea.sflag [#allocation9], %s236
        %s238 = sand.u32 %s128, 1
        %s239 = smul.addr %s238, 8
        %s240 = scalar_lea.vmem [#allocation8], %s239
        %v241 = vld [vmem:[%s205] sm:$0xff]
        %v242 = vld [vmem:[#allocation5] sm:$0x1]
        %v244 = vperm.slane %v242, 0
        %v246 = vmul.f32 %v244, %v241
        %247 = vst [vmem:[%s233] sm:$0xff] %v246
        %v248 = vld [vmem:[%s2] sm:$0x1]
        %v250 = vperm.slane %v248, 0
        %v252 = vmul.f32 %v250, %v241
        %253 = vst [vmem:[%s240] sm:$0xff] %v252
        %s254 = sand.u32 %s102, 1
        %s255 = scalar_lea.sflag [#allocation4], %s254
        %s256 = sand.u32 %s102, 1
        %s257 = smul.addr %s256, 8
        %s258 = scalar_lea.vmem [#allocation7], %s257
        %s259 = sand.u32 %s128, 1
        %s260 = scalar_lea.sflag [#allocation9], %s259
        %s261 = sand.u32 %s128, 1
        %s262 = smul.addr %s261, 8
        %s263 = scalar_lea.vmem [#allocation8], %s262
        // Predicated region
        $region41: #{tpu_custom_call.1} parent=31 // pred_check
          %p264 = pneg %p112
        $region42: #{tpu_custom_call.1} parent=31 // pred_check_branch
          %266 = sbr.rel (%p264) target = $region44
        $region43: #{tpu_custom_call.1} parent=31 // pred_region
          %268 = vsyncadd %s255, 0
          %s269 = smul.addr %s26, 8
          %s270 = scalar_lea.hbm %s3, %s269
          %s272 = sshll.u32 %s258, 4
          %s273 = int_to_ptr.vmem [resolvable:$true] %s272
          %s274 = sshll.u32 %s270, 4
          %s275 = int_to_ptr.hbm [resolvable:$true] %s274
          %277 = dma.vmem_to_hbm [thread:$0]  %s273, 128, %s275, %s255
        $region44: #{tpu_custom_call.1} parent=31 // pred_fallthru
          _
        // Predicated region
        $region45: #{tpu_custom_call.1} parent=31 // pred_check
          %p278 = pneg %p138
        $region46: #{tpu_custom_call.1} parent=31 // pred_check_branch
          %280 = sbr.rel (%p278) target = $region48
        $region47: #{tpu_custom_call.1} parent=31 // pred_region
          %282 = vsyncadd %s260, 0
          %s283 = smul.addr %s26, 8
          %s284 = scalar_lea.hbm %s4, %s283
          %s286 = sshll.u32 %s263, 4
          %s287 = int_to_ptr.vmem [resolvable:$true] %s286
          %s288 = sshll.u32 %s284, 4
          %s289 = int_to_ptr.hbm [resolvable:$true] %s288
          %291 = dma.vmem_to_hbm [thread:$0]  %s287, 128, %s289, %s260
        $region48: #{tpu_custom_call.1} parent=31 // pred_fallthru
          _
      $region32: #{tpu_custom_call.1} parent=5 // pred_fallthru
        _
      %p292 = scmp.le.s32.totalorder 2, %s21
      // Predicated region
      $region49: #{tpu_custom_call.1} parent=5 // pred_check
        %p293 = pneg %p292
      $region50: #{tpu_custom_call.1} parent=5 // pred_check_branch
        %295 = sbr.rel (%p293) target = $region52
      $region51: #{tpu_custom_call.1} parent=5 // pred_region
        %s296 = ssub.s32 %s21, 2
        // Predicated region
        $region53: #{tpu_custom_call.1} parent=51 // pred_check
          %p297 = pneg %p118
        $region54: #{tpu_custom_call.1} parent=51 // pred_check_branch
          %299 = sbr.rel (%p297) target = $region56
        $region55: #{tpu_custom_call.1} parent=51 // pred_region
          %s300 = sand.u32 %s103, 1
          %s301 = scalar_lea.sflag [#allocation4], %s300
          %s302 = sand.u32 %s103, 1
          %s303 = smul.addr %s302, 8
          %s304 = scalar_lea.vmem [#allocation7], %s303
          %306 = dma.done %s301, 128
        $region56: #{tpu_custom_call.1} parent=51 // pred_fallthru
          _
        // Predicated region
        $region57: #{tpu_custom_call.1} parent=51 // pred_check
          %p307 = pneg %p144
        $region58: #{tpu_custom_call.1} parent=51 // pred_check_branch
          %309 = sbr.rel (%p307) target = $region60
        $region59: #{tpu_custom_call.1} parent=51 // pred_region
          %s310 = sand.u32 %s129, 1
          %s311 = scalar_lea.sflag [#allocation9], %s310
          %s312 = sand.u32 %s129, 1
          %s313 = smul.addr %s312, 8
          %s314 = scalar_lea.vmem [#allocation8], %s313
          %316 = dma.done %s311, 128
        $region60: #{tpu_custom_call.1} parent=51 // pred_fallthru
          _
      $region52: #{tpu_custom_call.1} parent=5 // pred_fallthru
        _
    $region6: #{tpu_custom_call.1} parent=1 // loop_footer
      %s25 = sadd.s32 1, %s21
    $region7: #{tpu_custom_call.1} parent=1 // loop_footer_branch
      %20 = sbr.rel target = $region3
    $region8: #{tpu_custom_call.1} parent=1 // loop_exit
      _
    %317 = vsyncpa [#allocation3], 1
    %s318 = scalar_lea.sflag [#allocation3], 1
    %319 = vsyncpa %s318, 1
    %320 = vsyncpa [#allocation6], 1
    %321 = vsyncpa [#allocation4], 1
    %s322 = scalar_lea.sflag [#allocation4], 1
    %323 = vsyncpa %s322, 1
    %324 = vsyncpa [#allocation9], 1
    %s325 = scalar_lea.sflag [#allocation9], 1
    %326 = vsyncpa %s325, 1

</llo_original>
